<compile_context>
chip_gen: v5e
topology: v5e:2x2
jax: 0.10.0
libtpu: 0.0.40
codegen_flags: <defaults>
</compile_context>

<pallas_src>
import functools

import jax
import jax.numpy as jnp
from jax import lax
from jax.experimental import pallas as pl
from jax.experimental.pallas import tpu as pltpu

_SELU_ALPHA = 1.6732632423543772
_SELU_SCALE = 1.0507009873554805


def _activate(h, activation):
    """relu / elu / selu, matching the PyTorch module's options."""
    if activation == "selu":
        neg = _SELU_ALPHA * (jnp.exp(jnp.minimum(h, 0.0)) - 1.0)
        return _SELU_SCALE * jnp.where(h > 0.0, h, neg)
    if activation == "elu":
        neg = jnp.exp(jnp.minimum(h, 0.0)) - 1.0
        return jnp.where(h > 0.0, h, neg)
    return jnp.maximum(h, 0.0)  # 'relu' (module default)


def _sigmoid(x):
    return 1.0 / (1.0 + jnp.exp(-x))


def _highway_kernel(x_ref, w_ref, o_ref, xpad_ref, *, K, C, PB, TGC, activation):
    # x_ref, o_ref: (TG, 8, L)  -- PB = 8//C batch elements packed per 8-row
    #                              sublane tile, L on the lane axis.
    # w_ref:        (2C, K*C+1) -- fused [conv; gate] weight column per
    #                              (tap k, in-channel ci) at column k*C + ci,
    #                              fused bias in the last column (one VMEM tile,
    #                              resident across the whole grid).
    # xpad_ref:     (TG, 8, L + 2*pad) f32 scratch: the block with an explicit
    #               zero halo along L, so every tap is a static window load.
    TG, R, L = x_ref.shape
    pad = (K - 1) // 2
    C2 = 2 * C

    w = w_ref[...].astype(jnp.float32)            # (2C, K*C+1), tiny, hoisted
    bias = w[:, K * C:K * C + 1]                  # (2C, 1)

    # Leading-axis compute chunks bound the live vreg set while the DMA block
    # (and hence per-step overhead amortization) stays large.
    for t in range(TG // TGC):
        g0 = t * TGC

        xval = x_ref[g0:g0 + TGC].astype(jnp.float32)           # (TGC, 8, L)

        # Refresh the zero-padded scratch for this chunk ('same' conv padding).
        if K > 1:
            zeros_h = jnp.zeros((TGC, R, pad), jnp.float32)
            xpad_ref[g0:g0 + TGC, :, 0:pad] = zeros_h
            xpad_ref[g0:g0 + TGC, :, pad + L:pad + L + pad] = zeros_h
            xpad_ref[g0:g0 + TGC, :, pad:pad + L] = xval

        # Fused conv+gate pre-activations: one (TGC, 2C, L) accumulator per
        # packed batch element p (rows [0:C) conv, [C:2C) gate); bias folded
        # into the initializer.
        accs = [jnp.broadcast_to(bias, (TGC, C2, L)) for _ in range(PB)]
        for k in range(K):                      # static -> unrolled
            # xk[..., l] = x[..., l + k - pad], zero outside [0, L).
            if k == pad:
                xk = xval
            else:
                xk = xpad_ref[g0:g0 + TGC, :, k:k + L]
            for ci in range(C):
                wcol = w[:, k * C + ci:k * C + ci + 1]          # (2C, 1)
                for p in range(PB):
                    row = p * C + ci
                    # (2C,1) * (TGC,1,L) -> (TGC,2C,L) rank-1 VPU update.
                    accs[p] = accs[p] + wcol * xk[:, row:row + 1, :]

        # Highway blend, written back per packed element.
        for p in range(PB):
            h = _activate(accs[p][:, :C, :], activation)        # conv branch
            tgate = _sigmoid(accs[p][:, C:, :])                 # gate branch
            xres = xval[:, p * C:(p + 1) * C, :]
            out = xres + tgate * (h - xres)                     # = H*T + x*(1-T)
            o_ref[g0:g0 + TGC, p * C:(p + 1) * C, :] = out.astype(o_ref.dtype)


def _pick_tiles(G, L, itemsize, target_block_bytes):
    """Choose (groups per grid step, groups per compute chunk)."""
    bytes_per_group = 8 * L * itemsize
    cap = max(1, target_block_bytes // bytes_per_group)
    divisors = [d for d in range(1, G + 1) if G % d == 0]
    fitting = [d for d in divisors if d <= cap]
    tg = max(fitting) if fitting else 1
    # Keep the parallel grid >= 2 steps when possible so both v7x TensorCores
    # get work; on v5e/v6e (single TC) this is a no-op cost-wise.
    if G >= 2 and G // tg < 2:
        tg = max(d for d in divisors if d <= max(1, G // 2))
    # Compute-chunk size: keep each (TGC, 8, L) f32 value at <= ~8 vregs so the
    # accumulators and shifted operands stay in registers (no spills).
    tgc = max(1, min(tg, 1024 // max(L, 128)))
    while tg % tgc:
        tgc -= 1
    return tg, tgc


def conv1d_highway(x_ncl, w_conv, b_conv, w_gate, b_gate, *,
                   activation="relu", stride=1,
                   target_block_bytes=256 * 1024):
    """x_ncl: (N, Cin, L). Weights in PyTorch Conv1d layout (Cout, Cin, K)."""
    N, C, L = x_ncl.shape
    Cout, Cin, K = w_conv.shape
    assert Cin == C and Cout == C, "highway layer requires in/out channels equal"
    assert w_gate.shape == (C, C, K)
    assert K % 2 == 1, "even kernel sizes change the output length; unsupported"
    assert stride == 1, "only stride=1 is supported"
    assert activation in ("relu", "elu", "selu")
    assert 8 % C == 0, "TODO(synk): generalize row packing for C not dividing 8"
    PB = 8 // C                      # batch elements packed per 8-row tile
    assert N % PB == 0, "batch must be a multiple of 8 // C"

    R = PB * C                       # == 8 rows per sublane tile
    G = N // PB
    C2 = 2 * C
    pad = (K - 1) // 2

    tg, tgc = _pick_tiles(G, L, x_ncl.dtype.itemsize, target_block_bytes)
    grid = (G // tg,)

    # Free view of contiguous NCL data: PB elements per 8-row sublane tile.
    x3 = x_ncl.reshape(G, R, L)

    # Fused [conv; gate] parameters packed once on the host (tiny tensors):
    #   column k*C + ci -> (w_conv[:, ci, k], w_gate[:, ci, k]); last -> biases.
    wcols = jnp.concatenate([w_conv, w_gate], axis=0)              # (2C, C, K)
    wcols = jnp.transpose(wcols, (0, 2, 1)).reshape(C2, K * C)     # (2C, K*C)
    bias = jnp.concatenate([b_conv, b_gate]).reshape(C2, 1)
    w_packed = jnp.concatenate([wcols, bias], axis=1).astype(jnp.float32)

    # Explicit VMEM budget: double-buffered in/out blocks + padded scratch +
    # the single weight tile, with generous slack (well under v7x's 64 MiB).
    def _tile_bytes(rows, cols, isz):
        return (-(-rows // 8) * 8) * (-(-cols // 128) * 128) * isz
    blk = tg * _tile_bytes(R, L, 4)
    scr = tg * _tile_bytes(R, L + 2 * pad, 4)
    need = 4 * blk + scr + _tile_bytes(C2, K * C + 1, 4)
    vmem_limit = int(min(max(2 * need + (4 << 20), 8 << 20), 32 << 20))

    itemsize = x_ncl.dtype.itemsize
    cost = pl.CostEstimate(
        flops=int(2 * N * K * C * C2 * L + 6 * N * C * L),
        transcendentals=int(2 * N * C * L),
        bytes_accessed=int(2 * N * C * L * itemsize + w_packed.size * 4),
    )

    kernel = functools.partial(_highway_kernel, K=K, C=C, PB=PB, TGC=tgc,
                               activation=activation)
    out = pl.pallas_call(
        kernel,
        out_shape=jax.ShapeDtypeStruct((G, R, L), x_ncl.dtype),
        grid=grid,
        in_specs=[
            pl.BlockSpec((tg, R, L), lambda i: (i, 0, 0)),          # activations
            pl.BlockSpec((C2, K * C + 1), lambda i: (0, 0)),        # fused weights
        ],
        out_specs=pl.BlockSpec((tg, R, L), lambda i: (i, 0, 0)),
        scratch_shapes=[pltpu.VMEM((tg, R, L + 2 * pad), jnp.float32)],
        compiler_params=pltpu.CompilerParams(
            dimension_semantics=("parallel",),
            vmem_limit_bytes=vmem_limit,
        ),
        cost_estimate=cost,
    )(x3, w_packed)
    return out.reshape(N, C, L)


def _reference(x_ncl, w_conv, b_conv, w_gate, b_gate, activation="relu"):
    """Pure-JAX reference mirroring the PyTorch forward."""
    K = w_conv.shape[2]
    pad = (K - 1) // 2
    dn = lax.conv_dimension_numbers(x_ncl.shape, w_conv.shape, ("NCH", "OIH", "NCH"))
    conv = lax.conv_general_dilated(x_ncl, w_conv, (1,), [(pad, pad)],
                                    dimension_numbers=dn,
                                    precision=lax.Precision.HIGHEST)
    gate = lax.conv_general_dilated(x_ncl, w_gate, (1,), [(pad, pad)],
                                    dimension_numbers=dn,
                                    precision=lax.Precision.HIGHEST)
    H = _activate(conv + b_conv[None, :, None], activation)
    T = _sigmoid(gate + b_gate[None, :, None])
    return H * T + x_ncl * (1.0 - T)


if __name__ == "__main__":
    # Module config: inchannels = outchannels = 4, stride = 1, gate bias = -1.
    # Small, deterministic cases; the last one exercises K=5 and the in-kernel
    # compute chunking (long L).
    key = jax.random.PRNGKey(0)
    configs = [
        (16, 4, 128, 3, "relu"),
        (16, 4, 128, 3, "selu"),
        (8, 4, 1024, 5, "elu"),
    ]
    for idx, (N, C, L, K, act) in enumerate(configs):
        k0 = jax.random.fold_in(key, idx)
        kx, kwc, kbc, kwg = jax.random.split(k0, 4)

        x = jax.random.normal(kx, (N, C, L), dtype=jnp.float32)
        bound = (C * K) ** -0.5
        w_conv = jax.random.uniform(kwc, (C, C, K), jnp.float32, -bound, bound)
        b_conv = jax.random.uniform(kbc, (C,), jnp.float32, -bound, bound)
        w_gate = jax.random.uniform(kwg, (C, C, K), jnp.float32, -bound, bound)
        b_gate = jnp.full((C,), -1.0, dtype=jnp.float32)   # gate.bias.data.fill_(-1)

        out = conv1d_highway(x, w_conv, b_conv, w_gate, b_gate, activation=act)
        out = jax.block_until_ready(out)
        ref = _reference(x, w_conv, b_conv, w_gate, b_gate, activation=act)
        assert out.shape == (N, C, L)
        assert jnp.allclose(out, ref, atol=1e-4, rtol=1e-4), (
            f"mismatch vs JAX reference for config {(N, C, L, K, act)}")

    print("KERNEL_OK")
</pallas_src>

<mosaic_0001>
module attributes {stable_mosaic.version = 11 : i64} {
  func.func @_highway_kernel(%arg0: i32, %arg1: memref<4x8x128xf32, #tpu.memory_space<vmem>>, %arg2: memref<8x13xf32, #tpu.memory_space<vmem>>, %arg3: memref<4x8x128xf32, #tpu.memory_space<vmem>>, %arg4: memref<4x8x130xf32, #tpu.memory_space<vmem>>) attributes {dimension_semantics = [#tpu.dimension_semantics<parallel>], iteration_bounds = array<i64: 2>, scalar_prefetch = 0 : i64, scratch_operands = 1 : i64, tpu.core_type = #tpu.core_type<tc>, window_params = [{transform_indices = @transform_0, window_bounds = array<i64: 4, 8, 128>}, {pipeline_mode = #tpu.pipeline_mode<synchronous>, transform_indices = @transform_1, window_bounds = array<i64: 8, 13>}, {transform_indices = @transform_2, window_bounds = array<i64: 4, 8, 128>}]} {
    %c0 = arith.constant 0 : index
    %c0_0 = arith.constant 0 : index
    %0 = vector.load %arg2[%c0, %c0_0] : memref<8x13xf32, #tpu.memory_space<vmem>>, vector<8x13xf32>
    %1 = vector.extract_strided_slice %0 {offsets = [0, 12], sizes = [8, 1], strides = [1, 1]} : vector<8x13xf32> to vector<8x1xf32>
    %c0_1 = arith.constant 0 : index
    %c0_2 = arith.constant 0 : index
    %c0_3 = arith.constant 0 : index
    %2 = vector.load %arg1[%c0_1, %c0_2, %c0_3] : memref<4x8x128xf32, #tpu.memory_space<vmem>>, vector<4x8x128xf32>
    %cst = arith.constant 0.000000e+00 : f32
    %3 = vector.broadcast %cst : f32 to vector<4x8x1xf32>
    %c0_4 = arith.constant 0 : index
    %c0_5 = arith.constant 0 : index
    %c0_6 = arith.constant 0 : index
    %4 = vector.load %arg4[%c0_4, %c0_5, %c0_6] : memref<4x8x130xf32, #tpu.memory_space<vmem>>, vector<4x8x1xf32>
    tpu.vector_store %arg4[%c0_4, %c0_5, %c0_6], %3 {strides = array<i32>} : memref<4x8x130xf32, #tpu.memory_space<vmem>>, vector<4x8x1xf32>,
    %c0_7 = arith.constant 0 : index
    %c0_8 = arith.constant 0 : index
    %c129 = arith.constant 129 : index
    %5 = vector.load %arg4[%c0_7, %c0_8, %c129] : memref<4x8x130xf32, #tpu.memory_space<vmem>>, vector<4x8x1xf32>
    tpu.vector_store %arg4[%c0_7, %c0_8, %c129], %3 {strides = array<i32>} : memref<4x8x130xf32, #tpu.memory_space<vmem>>, vector<4x8x1xf32>,
    %c0_9 = arith.constant 0 : index
    %c0_10 = arith.constant 0 : index
    %c1 = arith.constant 1 : index
    %6 = vector.load %arg4[%c0_9, %c0_10, %c1] : memref<4x8x130xf32, #tpu.memory_space<vmem>>, vector<4x8x128xf32>
    tpu.vector_store %arg4[%c0_9, %c0_10, %c1], %2 {strides = array<i32>} : memref<4x8x130xf32, #tpu.memory_space<vmem>>, vector<4x8x128xf32>,
    %7 = vector.shape_cast %1 : vector<8x1xf32> to vector<1x8x1xf32>
    %8 = vector.broadcast %7 : vector<1x8x1xf32> to vector<4x8x128xf32>
    %9 = vector.shape_cast %1 : vector<8x1xf32> to vector<1x8x1xf32>
    %10 = vector.broadcast %9 : vector<1x8x1xf32> to vector<4x8x128xf32>
    %c0_11 = arith.constant 0 : index
    %c0_12 = arith.constant 0 : index
    %c0_13 = arith.constant 0 : index
    %11 = vector.load %arg4[%c0_11, %c0_12, %c0_13] : memref<4x8x130xf32, #tpu.memory_space<vmem>>, vector<4x8x128xf32>
    %12 = vector.extract_strided_slice %0 {offsets = [0, 0], sizes = [8, 1], strides = [1, 1]} : vector<8x13xf32> to vector<8x1xf32>
    %13 = vector.extract_strided_slice %11 {offsets = [0, 0, 0], sizes = [4, 1, 128], strides = [1, 1, 1]} : vector<4x8x128xf32> to vector<4x1x128xf32>
    %14 = vector.shape_cast %12 : vector<8x1xf32> to vector<1x8x1xf32>
    %15 = vector.broadcast %14 : vector<1x8x1xf32> to vector<4x8x128xf32>
    %16 = vector.broadcast %13 : vector<4x1x128xf32> to vector<4x8x128xf32>
    %17 = arith.mulf %15, %16 : vector<4x8x128xf32>
    %18 = arith.addf %8, %17 : vector<4x8x128xf32>
    %19 = vector.extract_strided_slice %11 {offsets = [0, 4, 0], sizes = [4, 1, 128], strides = [1, 1, 1]} : vector<4x8x128xf32> to vector<4x1x128xf32>
    %20 = vector.shape_cast %12 : vector<8x1xf32> to vector<1x8x1xf32>
    %21 = vector.broadcast %20 : vector<1x8x1xf32> to vector<4x8x128xf32>
    %22 = vector.broadcast %19 : vector<4x1x128xf32> to vector<4x8x128xf32>
    %23 = arith.mulf %21, %22 : vector<4x8x128xf32>
    %24 = arith.addf %10, %23 : vector<4x8x128xf32>
    %25 = vector.extract_strided_slice %0 {offsets = [0, 1], sizes = [8, 1], strides = [1, 1]} : vector<8x13xf32> to vector<8x1xf32>
    %26 = vector.extract_strided_slice %11 {offsets = [0, 1, 0], sizes = [4, 1, 128], strides = [1, 1, 1]} : vector<4x8x128xf32> to vector<4x1x128xf32>
    %27 = vector.shape_cast %25 : vector<8x1xf32> to vector<1x8x1xf32>
    %28 = vector.broadcast %27 : vector<1x8x1xf32> to vector<4x8x128xf32>
    %29 = vector.broadcast %26 : vector<4x1x128xf32> to vector<4x8x128xf32>
    %30 = arith.mulf %28, %29 : vector<4x8x128xf32>
    %31 = arith.addf %18, %30 : vector<4x8x128xf32>
    %32 = vector.extract_strided_slice %11 {offsets = [0, 5, 0], sizes = [4, 1, 128], strides = [1, 1, 1]} : vector<4x8x128xf32> to vector<4x1x128xf32>
    %33 = vector.shape_cast %25 : vector<8x1xf32> to vector<1x8x1xf32>
    %34 = vector.broadcast %33 : vector<1x8x1xf32> to vector<4x8x128xf32>
    %35 = vector.broadcast %32 : vector<4x1x128xf32> to vector<4x8x128xf32>
    %36 = arith.mulf %34, %35 : vector<4x8x128xf32>
    %37 = arith.addf %24, %36 : vector<4x8x128xf32>
    %38 = vector.extract_strided_slice %0 {offsets = [0, 2], sizes = [8, 1], strides = [1, 1]} : vector<8x13xf32> to vector<8x1xf32>
    %39 = vector.extract_strided_slice %11 {offsets = [0, 2, 0], sizes = [4, 1, 128], strides = [1, 1, 1]} : vector<4x8x128xf32> to vector<4x1x128xf32>
    %40 = vector.shape_cast %38 : vector<8x1xf32> to vector<1x8x1xf32>
    %41 = vector.broadcast %40 : vector<1x8x1xf32> to vector<4x8x128xf32>
    %42 = vector.broadcast %39 : vector<4x1x128xf32> to vector<4x8x128xf32>
    %43 = arith.mulf %41, %42 : vector<4x8x128xf32>
    %44 = arith.addf %31, %43 : vector<4x8x128xf32>
    %45 = vector.extract_strided_slice %11 {offsets = [0, 6, 0], sizes = [4, 1, 128], strides = [1, 1, 1]} : vector<4x8x128xf32> to vector<4x1x128xf32>
    %46 = vector.shape_cast %38 : vector<8x1xf32> to vector<1x8x1xf32>
    %47 = vector.broadcast %46 : vector<1x8x1xf32> to vector<4x8x128xf32>
    %48 = vector.broadcast %45 : vector<4x1x128xf32> to vector<4x8x128xf32>
    %49 = arith.mulf %47, %48 : vector<4x8x128xf32>
    %50 = arith.addf %37, %49 : vector<4x8x128xf32>
    %51 = vector.extract_strided_slice %0 {offsets = [0, 3], sizes = [8, 1], strides = [1, 1]} : vector<8x13xf32> to vector<8x1xf32>
    %52 = vector.extract_strided_slice %11 {offsets = [0, 3, 0], sizes = [4, 1, 128], strides = [1, 1, 1]} : vector<4x8x128xf32> to vector<4x1x128xf32>
    %53 = vector.shape_cast %51 : vector<8x1xf32> to vector<1x8x1xf32>
    %54 = vector.broadcast %53 : vector<1x8x1xf32> to vector<4x8x128xf32>
    %55 = vector.broadcast %52 : vector<4x1x128xf32> to vector<4x8x128xf32>
    %56 = arith.mulf %54, %55 : vector<4x8x128xf32>
    %57 = arith.addf %44, %56 : vector<4x8x128xf32>
    %58 = vector.extract_strided_slice %11 {offsets = [0, 7, 0], sizes = [4, 1, 128], strides = [1, 1, 1]} : vector<4x8x128xf32> to vector<4x1x128xf32>
    %59 = vector.shape_cast %51 : vector<8x1xf32> to vector<1x8x1xf32>
    %60 = vector.broadcast %59 : vector<1x8x1xf32> to vector<4x8x128xf32>
    %61 = vector.broadcast %58 : vector<4x1x128xf32> to vector<4x8x128xf32>
    %62 = arith.mulf %60, %61 : vector<4x8x128xf32>
    %63 = arith.addf %50, %62 : vector<4x8x128xf32>
    %64 = vector.extract_strided_slice %0 {offsets = [0, 4], sizes = [8, 1], strides = [1, 1]} : vector<8x13xf32> to vector<8x1xf32>
    %65 = vector.extract_strided_slice %2 {offsets = [0, 0, 0], sizes = [4, 1, 128], strides = [1, 1, 1]} : vector<4x8x128xf32> to vector<4x1x128xf32>
    %66 = vector.shape_cast %64 : vector<8x1xf32> to vector<1x8x1xf32>
    %67 = vector.broadcast %66 : vector<1x8x1xf32> to vector<4x8x128xf32>
    %68 = vector.broadcast %65 : vector<4x1x128xf32> to vector<4x8x128xf32>
    %69 = arith.mulf %67, %68 : vector<4x8x128xf32>
    %70 = arith.addf %57, %69 : vector<4x8x128xf32>
    %71 = vector.extract_strided_slice %2 {offsets = [0, 4, 0], sizes = [4, 1, 128], strides = [1, 1, 1]} : vector<4x8x128xf32> to vector<4x1x128xf32>
    %72 = vector.shape_cast %64 : vector<8x1xf32> to vector<1x8x1xf32>
    %73 = vector.broadcast %72 : vector<1x8x1xf32> to vector<4x8x128xf32>
    %74 = vector.broadcast %71 : vector<4x1x128xf32> to vector<4x8x128xf32>
    %75 = arith.mulf %73, %74 : vector<4x8x128xf32>
    %76 = arith.addf %63, %75 : vector<4x8x128xf32>
    %77 = vector.extract_strided_slice %0 {offsets = [0, 5], sizes = [8, 1], strides = [1, 1]} : vector<8x13xf32> to vector<8x1xf32>
    %78 = vector.extract_strided_slice %2 {offsets = [0, 1, 0], sizes = [4, 1, 128], strides = [1, 1, 1]} : vector<4x8x128xf32> to vector<4x1x128xf32>
    %79 = vector.shape_cast %77 : vector<8x1xf32> to vector<1x8x1xf32>
    %80 = vector.broadcast %79 : vector<1x8x1xf32> to vector<4x8x128xf32>
    %81 = vector.broadcast %78 : vector<4x1x128xf32> to vector<4x8x128xf32>
    %82 = arith.mulf %80, %81 : vector<4x8x128xf32>
    %83 = arith.addf %70, %82 : vector<4x8x128xf32>
    %84 = vector.extract_strided_slice %2 {offsets = [0, 5, 0], sizes = [4, 1, 128], strides = [1, 1, 1]} : vector<4x8x128xf32> to vector<4x1x128xf32>
    %85 = vector.shape_cast %77 : vector<8x1xf32> to vector<1x8x1xf32>
    %86 = vector.broadcast %85 : vector<1x8x1xf32> to vector<4x8x128xf32>
    %87 = vector.broadcast %84 : vector<4x1x128xf32> to vector<4x8x128xf32>
    %88 = arith.mulf %86, %87 : vector<4x8x128xf32>
    %89 = arith.addf %76, %88 : vector<4x8x128xf32>
    %90 = vector.extract_strided_slice %0 {offsets = [0, 6], sizes = [8, 1], strides = [1, 1]} : vector<8x13xf32> to vector<8x1xf32>
    %91 = vector.extract_strided_slice %2 {offsets = [0, 2, 0], sizes = [4, 1, 128], strides = [1, 1, 1]} : vector<4x8x128xf32> to vector<4x1x128xf32>
    %92 = vector.shape_cast %90 : vector<8x1xf32> to vector<1x8x1xf32>
    %93 = vector.broadcast %92 : vector<1x8x1xf32> to vector<4x8x128xf32>
    %94 = vector.broadcast %91 : vector<4x1x128xf32> to vector<4x8x128xf32>
    %95 = arith.mulf %93, %94 : vector<4x8x128xf32>
    %96 = arith.addf %83, %95 : vector<4x8x128xf32>
    %97 = vector.extract_strided_slice %2 {offsets = [0, 6, 0], sizes = [4, 1, 128], strides = [1, 1, 1]} : vector<4x8x128xf32> to vector<4x1x128xf32>
    %98 = vector.shape_cast %90 : vector<8x1xf32> to vector<1x8x1xf32>
    %99 = vector.broadcast %98 : vector<1x8x1xf32> to vector<4x8x128xf32>
    %100 = vector.broadcast %97 : vector<4x1x128xf32> to vector<4x8x128xf32>
    %101 = arith.mulf %99, %100 : vector<4x8x128xf32>
    %102 = arith.addf %89, %101 : vector<4x8x128xf32>
    %103 = vector.extract_strided_slice %0 {offsets = [0, 7], sizes = [8, 1], strides = [1, 1]} : vector<8x13xf32> to vector<8x1xf32>
    %104 = vector.extract_strided_slice %2 {offsets = [0, 3, 0], sizes = [4, 1, 128], strides = [1, 1, 1]} : vector<4x8x128xf32> to vector<4x1x128xf32>
    %105 = vector.shape_cast %103 : vector<8x1xf32> to vector<1x8x1xf32>
    %106 = vector.broadcast %105 : vector<1x8x1xf32> to vector<4x8x128xf32>
    %107 = vector.broadcast %104 : vector<4x1x128xf32> to vector<4x8x128xf32>
    %108 = arith.mulf %106, %107 : vector<4x8x128xf32>
    %109 = arith.addf %96, %108 : vector<4x8x128xf32>
    %110 = vector.extract_strided_slice %2 {offsets = [0, 7, 0], sizes = [4, 1, 128], strides = [1, 1, 1]} : vector<4x8x128xf32> to vector<4x1x128xf32>
    %111 = vector.shape_cast %103 : vector<8x1xf32> to vector<1x8x1xf32>
    %112 = vector.broadcast %111 : vector<1x8x1xf32> to vector<4x8x128xf32>
    %113 = vector.broadcast %110 : vector<4x1x128xf32> to vector<4x8x128xf32>
    %114 = arith.mulf %112, %113 : vector<4x8x128xf32>
    %115 = arith.addf %102, %114 : vector<4x8x128xf32>
    %c0_14 = arith.constant 0 : index
    %c0_15 = arith.constant 0 : index
    %c2 = arith.constant 2 : index
    %116 = vector.load %arg4[%c0_14, %c0_15, %c2] : memref<4x8x130xf32, #tpu.memory_space<vmem>>, vector<4x8x128xf32>
    %117 = vector.extract_strided_slice %0 {offsets = [0, 8], sizes = [8, 1], strides = [1, 1]} : vector<8x13xf32> to vector<8x1xf32>
    %118 = vector.extract_strided_slice %116 {offsets = [0, 0, 0], sizes = [4, 1, 128], strides = [1, 1, 1]} : vector<4x8x128xf32> to vector<4x1x128xf32>
    %119 = vector.shape_cast %117 : vector<8x1xf32> to vector<1x8x1xf32>
    %120 = vector.broadcast %119 : vector<1x8x1xf32> to vector<4x8x128xf32>
    %121 = vector.broadcast %118 : vector<4x1x128xf32> to vector<4x8x128xf32>
    %122 = arith.mulf %120, %121 : vector<4x8x128xf32>
    %123 = arith.addf %109, %122 : vector<4x8x128xf32>
    %124 = vector.extract_strided_slice %116 {offsets = [0, 4, 0], sizes = [4, 1, 128], strides = [1, 1, 1]} : vector<4x8x128xf32> to vector<4x1x128xf32>
    %125 = vector.shape_cast %117 : vector<8x1xf32> to vector<1x8x1xf32>
    %126 = vector.broadcast %125 : vector<1x8x1xf32> to vector<4x8x128xf32>
    %127 = vector.broadcast %124 : vector<4x1x128xf32> to vector<4x8x128xf32>
    %128 = arith.mulf %126, %127 : vector<4x8x128xf32>
    %129 = arith.addf %115, %128 : vector<4x8x128xf32>
    %130 = vector.extract_strided_slice %0 {offsets = [0, 9], sizes = [8, 1], strides = [1, 1]} : vector<8x13xf32> to vector<8x1xf32>
    %131 = vector.extract_strided_slice %116 {offsets = [0, 1, 0], sizes = [4, 1, 128], strides = [1, 1, 1]} : vector<4x8x128xf32> to vector<4x1x128xf32>
    %132 = vector.shape_cast %130 : vector<8x1xf32> to vector<1x8x1xf32>
    %133 = vector.broadcast %132 : vector<1x8x1xf32> to vector<4x8x128xf32>
    %134 = vector.broadcast %131 : vector<4x1x128xf32> to vector<4x8x128xf32>
    %135 = arith.mulf %133, %134 : vector<4x8x128xf32>
    %136 = arith.addf %123, %135 : vector<4x8x128xf32>
    %137 = vector.extract_strided_slice %116 {offsets = [0, 5, 0], sizes = [4, 1, 128], strides = [1, 1, 1]} : vector<4x8x128xf32> to vector<4x1x128xf32>
    %138 = vector.shape_cast %130 : vector<8x1xf32> to vector<1x8x1xf32>
    %139 = vector.broadcast %138 : vector<1x8x1xf32> to vector<4x8x128xf32>
    %140 = vector.broadcast %137 : vector<4x1x128xf32> to vector<4x8x128xf32>
    %141 = arith.mulf %139, %140 : vector<4x8x128xf32>
    %142 = arith.addf %129, %141 : vector<4x8x128xf32>
    %143 = vector.extract_strided_slice %0 {offsets = [0, 10], sizes = [8, 1], strides = [1, 1]} : vector<8x13xf32> to vector<8x1xf32>
    %144 = vector.extract_strided_slice %116 {offsets = [0, 2, 0], sizes = [4, 1, 128], strides = [1, 1, 1]} : vector<4x8x128xf32> to vector<4x1x128xf32>
    %145 = vector.shape_cast %143 : vector<8x1xf32> to vector<1x8x1xf32>
    %146 = vector.broadcast %145 : vector<1x8x1xf32> to vector<4x8x128xf32>
    %147 = vector.broadcast %144 : vector<4x1x128xf32> to vector<4x8x128xf32>
    %148 = arith.mulf %146, %147 : vector<4x8x128xf32>
    %149 = arith.addf %136, %148 : vector<4x8x128xf32>
    %150 = vector.extract_strided_slice %116 {offsets = [0, 6, 0], sizes = [4, 1, 128], strides = [1, 1, 1]} : vector<4x8x128xf32> to vector<4x1x128xf32>
    %151 = vector.shape_cast %143 : vector<8x1xf32> to vector<1x8x1xf32>
    %152 = vector.broadcast %151 : vector<1x8x1xf32> to vector<4x8x128xf32>
    %153 = vector.broadcast %150 : vector<4x1x128xf32> to vector<4x8x128xf32>
    %154 = arith.mulf %152, %153 : vector<4x8x128xf32>
    %155 = arith.addf %142, %154 : vector<4x8x128xf32>
    %156 = vector.extract_strided_slice %0 {offsets = [0, 11], sizes = [8, 1], strides = [1, 1]} : vector<8x13xf32> to vector<8x1xf32>
    %157 = vector.extract_strided_slice %116 {offsets = [0, 3, 0], sizes = [4, 1, 128], strides = [1, 1, 1]} : vector<4x8x128xf32> to vector<4x1x128xf32>
    %158 = vector.shape_cast %156 : vector<8x1xf32> to vector<1x8x1xf32>
    %159 = vector.broadcast %158 : vector<1x8x1xf32> to vector<4x8x128xf32>
    %160 = vector.broadcast %157 : vector<4x1x128xf32> to vector<4x8x128xf32>
    %161 = arith.mulf %159, %160 : vector<4x8x128xf32>
    %162 = arith.addf %149, %161 : vector<4x8x128xf32>
    %163 = vector.extract_strided_slice %116 {offsets = [0, 7, 0], sizes = [4, 1, 128], strides = [1, 1, 1]} : vector<4x8x128xf32> to vector<4x1x128xf32>
    %164 = vector.shape_cast %156 : vector<8x1xf32> to vector<1x8x1xf32>
    %165 = vector.broadcast %164 : vector<1x8x1xf32> to vector<4x8x128xf32>
    %166 = vector.broadcast %163 : vector<4x1x128xf32> to vector<4x8x128xf32>
    %167 = arith.mulf %165, %166 : vector<4x8x128xf32>
    %168 = arith.addf %155, %167 : vector<4x8x128xf32>
    %169 = vector.extract_strided_slice %162 {offsets = [0, 0, 0], sizes = [4, 4, 128], strides = [1, 1, 1]} : vector<4x8x128xf32> to vector<4x4x128xf32>
    %cst_16 = arith.constant 0.000000e+00 : f32
    %170 = vector.broadcast %cst_16 : f32 to vector<4x4x128xf32>
    %171 = arith.maximumf %169, %170 : vector<4x4x128xf32>
    %172 = vector.extract_strided_slice %162 {offsets = [0, 4, 0], sizes = [4, 4, 128], strides = [1, 1, 1]} : vector<4x8x128xf32> to vector<4x4x128xf32>
    %cst_17 = arith.constant 0.000000e+00 : f32
    %173 = vector.broadcast %cst_17 : f32 to vector<4x4x128xf32>
    %174 = arith.subf %173, %172 : vector<4x4x128xf32>
    %175 = math.exp %174 : vector<4x4x128xf32>
    %cst_18 = arith.constant 1.000000e+00 : f32
    %176 = vector.broadcast %cst_18 : f32 to vector<4x4x128xf32>
    %177 = arith.addf %176, %175 : vector<4x4x128xf32>
    %cst_19 = arith.constant 1.000000e+00 : f32
    %178 = vector.broadcast %cst_19 : f32 to vector<4x4x128xf32>
    %179 = arith.divf %178, %177 : vector<4x4x128xf32>
    %180 = vector.extract_strided_slice %2 {offsets = [0, 0, 0], sizes = [4, 4, 128], strides = [1, 1, 1]} : vector<4x8x128xf32> to vector<4x4x128xf32>
    %181 = arith.subf %171, %180 : vector<4x4x128xf32>
    %182 = arith.mulf %179, %181 : vector<4x4x128xf32>
    %183 = arith.addf %180, %182 : vector<4x4x128xf32>
    %c0_20 = arith.constant 0 : index
    %c0_21 = arith.constant 0 : index
    %c0_22 = arith.constant 0 : index
    %184 = vector.load %arg3[%c0_20, %c0_21, %c0_22] : memref<4x8x128xf32, #tpu.memory_space<vmem>>, vector<4x4x128xf32>
    tpu.vector_store %arg3[%c0_20, %c0_21, %c0_22], %183 {strides = array<i32>} : memref<4x8x128xf32, #tpu.memory_space<vmem>>, vector<4x4x128xf32>,
    %185 = vector.extract_strided_slice %168 {offsets = [0, 0, 0], sizes = [4, 4, 128], strides = [1, 1, 1]} : vector<4x8x128xf32> to vector<4x4x128xf32>
    %cst_23 = arith.constant 0.000000e+00 : f32
    %186 = vector.broadcast %cst_23 : f32 to vector<4x4x128xf32>
    %187 = arith.maximumf %185, %186 : vector<4x4x128xf32>
    %188 = vector.extract_strided_slice %168 {offsets = [0, 4, 0], sizes = [4, 4, 128], strides = [1, 1, 1]} : vector<4x8x128xf32> to vector<4x4x128xf32>
    %cst_24 = arith.constant 0.000000e+00 : f32
    %189 = vector.broadcast %cst_24 : f32 to vector<4x4x128xf32>
    %190 = arith.subf %189, %188 : vector<4x4x128xf32>
    %191 = math.exp %190 : vector<4x4x128xf32>
    %cst_25 = arith.constant 1.000000e+00 : f32
    %192 = vector.broadcast %cst_25 : f32 to vector<4x4x128xf32>
    %193 = arith.addf %192, %191 : vector<4x4x128xf32>
    %cst_26 = arith.constant 1.000000e+00 : f32
    %194 = vector.broadcast %cst_26 : f32 to vector<4x4x128xf32>
    %195 = arith.divf %194, %193 : vector<4x4x128xf32>
    %196 = vector.extract_strided_slice %2 {offsets = [0, 4, 0], sizes = [4, 4, 128], strides = [1, 1, 1]} : vector<4x8x128xf32> to vector<4x4x128xf32>
    %197 = arith.subf %187, %196 : vector<4x4x128xf32>
    %198 = arith.mulf %195, %197 : vector<4x4x128xf32>
    %199 = arith.addf %196, %198 : vector<4x4x128xf32>
    %c0_27 = arith.constant 0 : index
    %c4 = arith.constant 4 : index
    %c0_28 = arith.constant 0 : index
    %200 = vector.load %arg3[%c0_27, %c4, %c0_28] : memref<4x8x128xf32, #tpu.memory_space<vmem>>, vector<4x4x128xf32>
    tpu.vector_store %arg3[%c0_27, %c4, %c0_28], %199 {strides = array<i32>} : memref<4x8x128xf32, #tpu.memory_space<vmem>>, vector<4x4x128xf32>,
    return
  }
  func.func @transform_0(%arg0: i32) -> (i32, i32, i32) {
    %c0_i32 = arith.constant 0 : i32
    %c0_i32_0 = arith.constant 0 : i32
    %c0_i32_1 = arith.constant 0 : i32
    return %arg0, %c0_i32, %c0_i32_0 : i32, i32, i32
  }
  func.func @transform_1(%arg0: i32) -> (i32, i32) {
    %c0_i32 = arith.constant 0 : i32
    %c0_i32_0 = arith.constant 0 : i32
    %c0_i32_1 = arith.constant 0 : i32
    return %c0_i32, %c0_i32_0 : i32, i32
  }
  func.func @transform_2(%arg0: i32) -> (i32, i32, i32) {
    %c0_i32 = arith.constant 0 : i32
    %c0_i32_0 = arith.constant 0 : i32
    %c0_i32_1 = arith.constant 0 : i32
    return %arg0, %c0_i32, %c0_i32_0 : i32, i32, i32
  }
}

</mosaic_0001>

<llo_original>
// kernel: tpu_custom_call.1
$region0: #{tpu_custom_call.1}
  #allocation0 [shape = 'u32[]', space=smem, size = 0x4, offset = 0x4, fixed_abs, tag = 'smem constant byte address 0x4 - core index']
  #allocation1 [shape = 'u32[72,128]{1,0:T(1,128)}', space=vmem, size = 0x9000, scoped, tag = 'internal scratch']
  #allocation2 [shape = 'f32[4,8,130]{2,1,0:T(8,128)}', space=vmem, size = 0x8000, scoped, tag = 'scratch operand']
  %s0 = inlined_call_operand.hbm [shape: f32[8,8,128], index: 0, kind: input, shape index: {}]
  %s1 = inlined_call_operand.hbm [shape: f32[8,13], index: 1, kind: input, shape index: {}]
  %s2 = inlined_call_operand.hbm [shape: f32[8,8,128], index: 2, kind: output, shape index: {}]
  %s3 = sld [smem:[#allocation0]]
  $region49: #{tpu_custom_call.1} parent=0
    _
  %s5 = ssub.s32 1, %s3
  %s6 = scalar_select 0, %s5, %s3
  $region1: #{tpu_custom_call.1} parent=0
    #allocation3 [shape = 'u8[32768]{0}', space=vmem, size = 0x8000, scoped, tag = 'input window, operand 0']
    #allocation4 [shape = 's32[2]{0}', space=sflag, size = 0x8, scoped, tag = 'scoped memory for tpu_custom_call.1']
    #allocation5 [shape = 's32[2]{0}', space=sflag, size = 0x8, scoped, tag = 'scoped memory for tpu_custom_call.1']
    #allocation6 [shape = 'u8[4096]{0}', space=vmem, size = 0x1000, scoped, tag = 'input window, operand 1, single buffered']
    #allocation7 [shape = 's32[1]{0}', space=sflag, size = 0x4, scoped, tag = 'scoped memory for tpu_custom_call.1']
    #allocation8 [shape = 'u8[32768]{0}', space=vmem, size = 0x8000, scoped, tag = 'output window, operand 0']
    %7 = vsyncpa [#allocation4], 0
    %s8 = scalar_lea.sflag [#allocation4], 1
    %9 = vsyncpa %s8, 0
    %10 = vsyncpa [#allocation7], 0
    %11 = vsyncpa [#allocation5], 0
    %s12 = scalar_lea.sflag [#allocation5], 1
    %13 = vsyncpa %s12, 0
    loop: start=0, step=1, limit=4
    $region2: #{tpu_custom_call.1} parent=1 // loop_pre_header
      _
    $region3: #{tpu_custom_call.1} parent=1 // loop_header
      %s15 = sphi 0, %s19
      %p16 = scmp.ge.s32.totalorder %s15, 4
      %s25 = sphi 0, %s27
      %s28 = sphi 0, %s25
      %s29 = sphi 0, %s28
      %s45 = sphi 0, %s29
      %s49 = sphi 0, %s49
      %s51 = sphi 0, %s49
      %s52 = sphi 0, %s51
      %s66 = sphi 0, %s52
      %s72 = sphi 0, %s74
      %s75 = sphi 0, %s72
      %s76 = sphi 0, %s75
      %s92 = sphi 0, %s76
    $region4: #{tpu_custom_call.1} parent=1 // loop_header_branch
      %18 = sbr.rel (%p16) target = $region8
    $region5: #{tpu_custom_call.1} parent=1 // loop_body
      %s20 = ssub.s32 %s15, 1
      %s21 = ssub.s32 %s15, 2
      %s22 = sadd.s32 %s15, 1
      %s23 = ssub.s32 %s15, %s22
      %p24 = scmp.eq.s32.totalorder %s23, 0
      %s26 = sadd.s32 %s25, 1
      %s27 = scalar_select %p24, %s25, %s26
      %p30 = pneg %p24
      %p31 = scmp.eq.s32.totalorder %s15, 1
      %p32 = por %p30, %p31
      %p33 = scmp.ne.s32.totalorder %s25, %s28
      %p34 = scmp.eq.s32.totalorder %s15, 0
      %p35 = por %p33, %p34
      %p36 = scmp.ne.s32.totalorder %s25, %s28
      %p37 = scmp.eq.s32.totalorder %s20, 1
      %p38 = por %p36, %p37
      %p39 = scmp.ne.s32.totalorder %s28, %s29
      %p40 = scmp.eq.s32.totalorder %s20, 0
      %p41 = por %p39, %p40
      %p42 = scmp.ne.s32.totalorder %s28, %s29
      %p43 = scmp.eq.s32.totalorder %s21, 1
      %p44 = por %p42, %p43
      %p46 = scmp.ne.s32.totalorder %s29, %s45
      %p47 = scmp.eq.s32.totalorder %s21, 0
      %p48 = por %p46, %p47
      %s50 = sadd.s32 %s49, 1
      %p53 = scmp.eq.s32.totalorder %s15, 1
      %p54 = scmp.ne.s32.totalorder %s49, %s51
      %p55 = scmp.eq.s32.totalorder %s15, 0
      %p56 = por %p54, %p55
      %p57 = scmp.ne.s32.totalorder %s49, %s51
      %p58 = scmp.eq.s32.totalorder %s20, 1
      %p59 = por %p57, %p58
      %p60 = scmp.ne.s32.totalorder %s51, %s52
      %p61 = scmp.eq.s32.totalorder %s20, 0
      %p62 = por %p60, %p61
      %p63 = scmp.ne.s32.totalorder %s51, %s52
      %p64 = scmp.eq.s32.totalorder %s21, 1
      %p65 = por %p63, %p64
      %p67 = scmp.ne.s32.totalorder %s52, %s66
      %p68 = scmp.eq.s32.totalorder %s21, 0
      %p69 = por %p67, %p68
      %s70 = ssub.s32 %s15, %s22
      %p71 = scmp.eq.s32.totalorder %s70, 0
      %s73 = sadd.s32 %s72, 1
      %s74 = scalar_select %p71, %s72, %s73
      %p77 = pneg %p71
      %p78 = scmp.eq.s32.totalorder %s15, 1
      %p79 = por %p77, %p78
      %p80 = scmp.ne.s32.totalorder %s72, %s75
      %p81 = scmp.eq.s32.totalorder %s15, 0
      %p82 = por %p80, %p81
      %p83 = scmp.ne.s32.totalorder %s72, %s75
      %p84 = scmp.eq.s32.totalorder %s20, 1
      %p85 = por %p83, %p84
      %p86 = scmp.ne.s32.totalorder %s75, %s76
      %p87 = scmp.eq.s32.totalorder %s20, 0
      %p88 = por %p86, %p87
      %p89 = scmp.ne.s32.totalorder %s75, %s76
      %p90 = scmp.eq.s32.totalorder %s21, 1
      %p91 = por %p89, %p90
      %p93 = scmp.ne.s32.totalorder %s76, %s92
      %p94 = scmp.eq.s32.totalorder %s21, 0
      %p95 = por %p93, %p94
      %p96 = scmp.le.s32.totalorder 1, %s15
      %p97 = scmp.lt.s32.totalorder %s15, 3
      %p98 = pnand %p96, %p97
      %p99 = pneg %p98
      // Predicated region
      $region9: #{tpu_custom_call.1} parent=5 // pred_check
        _
      $region10: #{tpu_custom_call.1} parent=5 // pred_check_branch
        %101 = sbr.rel (%p98) target = $region12
      $region11: #{tpu_custom_call.1} parent=5 // pred_region
        %s102 = ssub.s32 %s15, 1
        // Predicated region
        $region13: #{tpu_custom_call.1} parent=11 // pred_check
          %p103 = pneg %p62
        $region14: #{tpu_custom_call.1} parent=11 // pred_check_branch
          %105 = sbr.rel (%p103) target = $region16
        $region15: #{tpu_custom_call.1} parent=11 // pred_region
          %107 = vsyncadd [#allocation7], 0
          %s109 = sshll.u32 %s1, 4
          %s110 = int_to_ptr.hbm [resolvable:$true] %s109
          %s111 = sshll.u32 [#allocation6], 4
          %s112 = int_to_ptr.vmem [resolvable:$true] %s111
          %114 = dma.hbm_to_vmem [thread:$0]  %s110, 128, %s112, [#allocation7]
        $region16: #{tpu_custom_call.1} parent=11 // pred_fallthru
          _
      $region12: #{tpu_custom_call.1} parent=5 // pred_fallthru
        _
      %p115 = scmp.lt.s32.totalorder %s15, 2
      // Predicated region
      $region17: #{tpu_custom_call.1} parent=5 // pred_check
        %p116 = pneg %p115
      $region18: #{tpu_custom_call.1} parent=5 // pred_check_branch
        %118 = sbr.rel (%p116) target = $region20
      $region19: #{tpu_custom_call.1} parent=5 // pred_region
        // Predicated region
        $region21: #{tpu_custom_call.1} parent=19 // pred_check
          %p119 = pneg %p35
        $region22: #{tpu_custom_call.1} parent=19 // pred_check_branch
          %121 = sbr.rel (%p119) target = $region24
        $region23: #{tpu_custom_call.1} parent=19 // pred_region
          %s122 = sand.u32 %s25, 1
          %s123 = scalar_lea.sflag [#allocation4], %s122
          %s124 = sand.u32 %s25, 1
          %s125 = smul.addr %s124, 32
          %s126 = scalar_lea.vmem [#allocation3], %s125
          %s127 = smul.u32 4, %s15
          %129 = vsyncadd %s123, 0
          %s130 = smul.addr %s127, 8
          %s131 = scalar_lea.hbm %s0, %s130
          %s132 = sshll.u32 %s131, 4
          %s133 = int_to_ptr.hbm [resolvable:$true] %s132
          %s134 = sshll.u32 %s126, 4
          %s135 = int_to_ptr.vmem [resolvable:$true] %s134
          %140 = dma.hbm_to_vmem [thread:$0]  %s133, 512, %s135, %s123, 128, 128, 8
        $region24: #{tpu_custom_call.1} parent=19 // pred_fallthru
          _
      $region20: #{tpu_custom_call.1} parent=5 // pred_fallthru
        _
      %p141 = scmp.le.s32.totalorder 1, %s15
      %p142 = scmp.lt.s32.totalorder %s15, 3
      %p143 = pnand %p141, %p142
      %p144 = pneg %p143
      // Predicated region
      $region25: #{tpu_custom_call.1} parent=5 // pred_check
        _
      $region26: #{tpu_custom_call.1} parent=5 // pred_check_branch
        %146 = sbr.rel (%p143) target = $region28
      $region27: #{tpu_custom_call.1} parent=5 // pred_region
        %s147 = ssub.s32 %s15, 1
        %s148 = sand.u32 %s28, 1
        %s149 = scalar_lea.sflag [#allocation4], %s148
        %s150 = sand.u32 %s28, 1
        %s151 = smul.addr %s150, 32
        %s152 = scalar_lea.vmem [#allocation3], %s151
        // Predicated region
        $region29: #{tpu_custom_call.1} parent=27 // pred_check
          %p153 = pneg %p41
        $region30: #{tpu_custom_call.1} parent=27 // pred_check_branch
          %155 = sbr.rel (%p153) target = $region32
        $region31: #{tpu_custom_call.1} parent=27 // pred_region
          %157 = dma.done %s149, 512
        $region32: #{tpu_custom_call.1} parent=27 // pred_fallthru
          _
        // Predicated region
        $region33: #{tpu_custom_call.1} parent=27 // pred_check
          %p158 = pneg %p62
        $region34: #{tpu_custom_call.1} parent=27 // pred_check_branch
          %160 = sbr.rel (%p158) target = $region36
        $region35: #{tpu_custom_call.1} parent=27 // pred_region
          %162 = dma.done [#allocation7], 128
        $region36: #{tpu_custom_call.1} parent=27 // pred_fallthru
          _
        %s163 = sand.u32 %s28, 1
        %s164 = scalar_lea.sflag [#allocation4], %s163
        %s165 = sand.u32 %s28, 1
        %s166 = smul.addr %s165, 32
        %s167 = scalar_lea.vmem [#allocation3], %s166
        %p168 = pneg %p41
        %p169 = pneg %p38
        %p170 = pneg %p62
        %p171 = pneg %p59
        %p172 = pneg %p88
        %p173 = pneg %p85
        %s174 = sand.u32 %s75, 1
        %s175 = scalar_lea.sflag [#allocation5], %s174
        %s176 = sand.u32 %s75, 1
        %s177 = smul.addr %s176, 32
        %s178 = scalar_lea.vmem [#allocation8], %s177
        %s179 = smul.u32 4, %s20
        %s180 = smul.u32 4, %s20
        %v181 = vld [vmem:[#allocation6] sm:$0xff]
        %v182 = vld [vmem:[%s152] sm:$0xff]
        %v183 = vld [vmem:[%s152 + $0x8] sm:$0xff]
        %v184 = vld [vmem:[%s152 + $0x10] sm:$0xff]
        %v185 = vld [vmem:[%s152 + $0x18] sm:$0xff]
        %vm186 = vcmask 7168
        %187 = vst.msk [vmem:[#allocation2] sm:$0xff] %vm186, 0.0
        %188 = vst.msk [vmem:[#allocation2 + $0x10] sm:$0xff] %vm186, 0.0
        %189 = vst.msk [vmem:[#allocation2 + $0x20] sm:$0xff] %vm186, 0.0
        %190 = vst.msk [vmem:[#allocation2 + $0x30] sm:$0xff] %vm186, 0.0
        %vm191 = vcmask 15368
        %192 = vst.msk [vmem:[#allocation2 + $0x8] sm:$0xff] %vm191, 0.0
        %193 = vst.msk [vmem:[#allocation2 + $0x18] sm:$0xff] %vm191, 0.0
        %194 = vst.msk [vmem:[#allocation2 + $0x28] sm:$0xff] %vm191, 0.0
        %195 = vst.msk [vmem:[#allocation2 + $0x38] sm:$0xff] %vm191, 0.0
        %200 = vrot.lane.b32.xlu0 %v182, 1
        %v201 = vpop.permute.xlu0 %200
        %202 = vrot.lane.b32.xlu0 %v183, 1
        %v203 = vpop.permute.xlu0 %202
        %204 = vrot.lane.b32.xlu0 %v184, 1
        %v205 = vpop.permute.xlu0 %204
        %206 = vrot.lane.b32.xlu0 %v185, 1
        %v207 = vpop.permute.xlu0 %206
        %vm212 = vcmask 1047560
        %213 = vst.msk [vmem:[#allocation2] sm:$0xff] %vm212, %v201
        %214 = vst.msk [vmem:[#allocation2 + $0x8] sm:$0xff] %vm186, %v201
        %215 = vst.msk [vmem:[#allocation2 + $0x10] sm:$0xff] %vm212, %v203
        %216 = vst.msk [vmem:[#allocation2 + $0x18] sm:$0xff] %vm186, %v203
        %217 = vst.msk [vmem:[#allocation2 + $0x20] sm:$0xff] %vm212, %v205
        %218 = vst.msk [vmem:[#allocation2 + $0x28] sm:$0xff] %vm186, %v205
        %219 = vst.msk [vmem:[#allocation2 + $0x30] sm:$0xff] %vm212, %v207
        %220 = vst.msk [vmem:[#allocation2 + $0x38] sm:$0xff] %vm186, %v207
        %222 = vset.pattern.permute.xlu0 12
        %223 = vperm.xlu0 %222, %v181
        %v224 = vpop.permute.xlu0 %223
        %v226 = vld [vmem:[#allocation2] sm:$0xff]
        %v227 = vld [vmem:[#allocation2 + $0x10] sm:$0xff]
        %v228 = vld [vmem:[#allocation2 + $0x20] sm:$0xff]
        %v229 = vld [vmem:[#allocation2 + $0x30] sm:$0xff]
        %230 = vset.pattern.permute.xlu0 0
        %231 = vperm.xlu0 %230, %v181
        %v232 = vpop.permute.xlu0 %231
        %v234 = vperm.slane %v226, 0
        %v235 = vperm.slane %v227, 0
        %v236 = vperm.slane %v228, 0
        %v237 = vperm.slane %v229, 0
        %v238 = vmul.f32 %v232, %v234
        %v239 = vmul.f32 %v232, %v235
        %v240 = vmul.f32 %v232, %v236
        %v241 = vmul.f32 %v232, %v237
        %v242 = vadd.f32 %v224, %v238
        %v243 = vadd.f32 %v224, %v239
        %v244 = vadd.f32 %v224, %v240
        %v245 = vadd.f32 %v224, %v241
        %v246 = vperm.slane %v226, 4
        %v247 = vperm.slane %v227, 4
        %v248 = vperm.slane %v228, 4
        %v249 = vperm.slane %v229, 4
        %v250 = vmul.f32 %v232, %v246
        %v251 = vmul.f32 %v232, %v247
        %v252 = vmul.f32 %v232, %v248
        %v253 = vmul.f32 %v232, %v249
        %v254 = vadd.f32 %v224, %v250
        %v255 = vadd.f32 %v224, %v251
        %v256 = vadd.f32 %v224, %v252
        %v257 = vadd.f32 %v224, %v253
        %258 = vset.pattern.permute.xlu0 1
        %259 = vperm.xlu0 %258, %v181
        %v260 = vpop.permute.xlu0 %259
        %v262 = vperm.slane %v226, 1
        %v263 = vperm.slane %v227, 1
        %v264 = vperm.slane %v228, 1
        %v265 = vperm.slane %v229, 1
        %v266 = vmul.f32 %v260, %v262
        %v267 = vmul.f32 %v260, %v263
        %v268 = vmul.f32 %v260, %v264
        %v269 = vmul.f32 %v260, %v265
        %v270 = vadd.f32 %v242, %v266
        %v271 = vadd.f32 %v243, %v267
        %v272 = vadd.f32 %v244, %v268
        %v273 = vadd.f32 %v245, %v269
        %v274 = vperm.slane %v226, 5
        %v275 = vperm.slane %v227, 5
        %v276 = vperm.slane %v228, 5
        %v277 = vperm.slane %v229, 5
        %v278 = vmul.f32 %v260, %v274
        %v279 = vmul.f32 %v260, %v275
        %v280 = vmul.f32 %v260, %v276
        %v281 = vmul.f32 %v260, %v277
        %v282 = vadd.f32 %v254, %v278
        %v283 = vadd.f32 %v255, %v279
        %v284 = vadd.f32 %v256, %v280
        %v285 = vadd.f32 %v257, %v281
        %286 = vset.pattern.permute.xlu0 2
        %287 = vperm.xlu0 %286, %v181
        %v288 = vpop.permute.xlu0 %287
        %v290 = vperm.slane %v226, 2
        %v291 = vperm.slane %v227, 2
        %v292 = vperm.slane %v228, 2
        %v293 = vperm.slane %v229, 2
        %v294 = vmul.f32 %v288, %v290
        %v295 = vmul.f32 %v288, %v291
        %v296 = vmul.f32 %v288, %v292
        %v297 = vmul.f32 %v288, %v293
        %v298 = vadd.f32 %v270, %v294
        %v299 = vadd.f32 %v271, %v295
        %v300 = vadd.f32 %v272, %v296
        %v301 = vadd.f32 %v273, %v297
        %v302 = vperm.slane %v226, 6
        %v303 = vperm.slane %v227, 6
        %v304 = vperm.slane %v228, 6
        %v305 = vperm.slane %v229, 6
        %v306 = vmul.f32 %v288, %v302
        %v307 = vmul.f32 %v288, %v303
        %v308 = vmul.f32 %v288, %v304
        %v309 = vmul.f32 %v288, %v305
        %v310 = vadd.f32 %v282, %v306
        %v311 = vadd.f32 %v283, %v307
        %v312 = vadd.f32 %v284, %v308
        %v313 = vadd.f32 %v285, %v309
        %314 = vset.pattern.permute.xlu0 3
        %315 = vperm.xlu0 %314, %v181
        %v316 = vpop.permute.xlu0 %315
        %v318 = vperm.slane %v226, 3
        %v319 = vperm.slane %v227, 3
        %v320 = vperm.slane %v228, 3
        %v321 = vperm.slane %v229, 3
        %v322 = vmul.f32 %v316, %v318
        %v323 = vmul.f32 %v316, %v319
        %v324 = vmul.f32 %v316, %v320
        %v325 = vmul.f32 %v316, %v321
        %v326 = vadd.f32 %v298, %v322
        %v327 = vadd.f32 %v299, %v323
        %v328 = vadd.f32 %v300, %v324
        %v329 = vadd.f32 %v301, %v325
        %v330 = vperm.slane %v226, 7
        %v331 = vperm.slane %v227, 7
        %v332 = vperm.slane %v228, 7
        %v333 = vperm.slane %v229, 7
        %v334 = vmul.f32 %v316, %v330
        %v335 = vmul.f32 %v316, %v331
        %v336 = vmul.f32 %v316, %v332
        %v337 = vmul.f32 %v316, %v333
        %v338 = vadd.f32 %v310, %v334
        %v339 = vadd.f32 %v311, %v335
        %v340 = vadd.f32 %v312, %v336
        %v341 = vadd.f32 %v313, %v337
        %342 = vset.pattern.permute.xlu0 4
        %343 = vperm.xlu0 %342, %v181
        %v344 = vpop.permute.xlu0 %343
        %v346 = vperm.slane %v182, 0
        %v347 = vperm.slane %v183, 0
        %v348 = vperm.slane %v184, 0
        %v349 = vperm.slane %v185, 0
        %v350 = vmul.f32 %v344, %v346
        %v351 = vmul.f32 %v344, %v347
        %v352 = vmul.f32 %v344, %v348
        %v353 = vmul.f32 %v344, %v349
        %v354 = vadd.f32 %v326, %v350
        %v355 = vadd.f32 %v327, %v351
        %v356 = vadd.f32 %v328, %v352
        %v357 = vadd.f32 %v329, %v353
        %v358 = vperm.slane %v182, 4
        %v359 = vperm.slane %v183, 4
        %v360 = vperm.slane %v184, 4
        %v361 = vperm.slane %v185, 4
        %v362 = vmul.f32 %v344, %v358
        %v363 = vmul.f32 %v344, %v359
        %v364 = vmul.f32 %v344, %v360
        %v365 = vmul.f32 %v344, %v361
        %v366 = vadd.f32 %v338, %v362
        %v367 = vadd.f32 %v339, %v363
        %v368 = vadd.f32 %v340, %v364
        %v369 = vadd.f32 %v341, %v365
        %370 = vset.pattern.permute.xlu0 5
        %371 = vperm.xlu0 %370, %v181
        %v372 = vpop.permute.xlu0 %371
        %v374 = vperm.slane %v182, 1
        %v375 = vperm.slane %v183, 1
        %v376 = vperm.slane %v184, 1
        %v377 = vperm.slane %v185, 1
        %v378 = vmul.f32 %v372, %v374
        %v379 = vmul.f32 %v372, %v375
        %v380 = vmul.f32 %v372, %v376
        %v381 = vmul.f32 %v372, %v377
        %v382 = vadd.f32 %v354, %v378
        %v383 = vadd.f32 %v355, %v379
        %v384 = vadd.f32 %v356, %v380
        %v385 = vadd.f32 %v357, %v381
        %v386 = vperm.slane %v182, 5
        %v387 = vperm.slane %v183, 5
        %v388 = vperm.slane %v184, 5
        %v389 = vperm.slane %v185, 5
        %v390 = vmul.f32 %v372, %v386
        %v391 = vmul.f32 %v372, %v387
        %v392 = vmul.f32 %v372, %v388
        %v393 = vmul.f32 %v372, %v389
        %v394 = vadd.f32 %v366, %v390
        %v395 = vadd.f32 %v367, %v391
        %v396 = vadd.f32 %v368, %v392
        %v397 = vadd.f32 %v369, %v393
        %398 = vset.pattern.permute.xlu0 6
        %399 = vperm.xlu0 %398, %v181
        %v400 = vpop.permute.xlu0 %399
        %v402 = vperm.slane %v182, 2
        %v403 = vperm.slane %v183, 2
        %v404 = vperm.slane %v184, 2
        %v405 = vperm.slane %v185, 2
        %v406 = vmul.f32 %v400, %v402
        %v407 = vmul.f32 %v400, %v403
        %v408 = vmul.f32 %v400, %v404
        %v409 = vmul.f32 %v400, %v405
        %v410 = vadd.f32 %v382, %v406
        %v411 = vadd.f32 %v383, %v407
        %v412 = vadd.f32 %v384, %v408
        %v413 = vadd.f32 %v385, %v409
        %v414 = vperm.slane %v182, 6
        %v415 = vperm.slane %v183, 6
        %v416 = vperm.slane %v184, 6
        %v417 = vperm.slane %v185, 6
        %v418 = vmul.f32 %v400, %v414
        %v419 = vmul.f32 %v400, %v415
        %v420 = vmul.f32 %v400, %v416
        %v421 = vmul.f32 %v400, %v417
        %v422 = vadd.f32 %v394, %v418
        %v423 = vadd.f32 %v395, %v419
        %v424 = vadd.f32 %v396, %v420
        %v425 = vadd.f32 %v397, %v421
        %426 = vset.pattern.permute.xlu0 7
        %427 = vperm.xlu0 %426, %v181
        %v428 = vpop.permute.xlu0 %427
        %v430 = vperm.slane %v182, 3
        %v431 = vperm.slane %v183, 3
        %v432 = vperm.slane %v184, 3
        %v433 = vperm.slane %v185, 3
        %v434 = vmul.f32 %v428, %v430
        %v435 = vmul.f32 %v428, %v431
        %v436 = vmul.f32 %v428, %v432
        %v437 = vmul.f32 %v428, %v433
        %v438 = vadd.f32 %v410, %v434
        %v439 = vadd.f32 %v411, %v435
        %v440 = vadd.f32 %v412, %v436
        %v441 = vadd.f32 %v413, %v437
        %v442 = vperm.slane %v182, 7
        %v443 = vperm.slane %v183, 7
        %v444 = vperm.slane %v184, 7
        %v445 = vperm.slane %v185, 7
        %v446 = vmul.f32 %v428, %v442
        %v447 = vmul.f32 %v428, %v443
        %v448 = vmul.f32 %v428, %v444
        %v449 = vmul.f32 %v428, %v445
        %v450 = vadd.f32 %v422, %v446
        %v451 = vadd.f32 %v423, %v447
        %v452 = vadd.f32 %v424, %v448
        %v453 = vadd.f32 %v425, %v449
        %v454 = vld [vmem:[#allocation2] sm:$0xff]
        %v455 = vld [vmem:[#allocation2 + $0x8] sm:$0xff]
        %v456 = vld [vmem:[#allocation2 + $0x10] sm:$0xff]
        %v457 = vld [vmem:[#allocation2 + $0x18] sm:$0xff]
        %v458 = vld [vmem:[#allocation2 + $0x20] sm:$0xff]
        %v459 = vld [vmem:[#allocation2 + $0x28] sm:$0xff]
        %v460 = vld [vmem:[#allocation2 + $0x30] sm:$0xff]
        %v461 = vld [vmem:[#allocation2 + $0x38] sm:$0xff]
        %462 = vset.pattern.permute.xlu0 8
        %463 = vperm.xlu0 %462, %v181
        %v464 = vpop.permute.xlu0 %463
        %v466 = vperm.slane %v454, 0
        %v467 = vperm.slane %v455, 0
        %v468 = vperm.slane %v456, 0
        %v469 = vperm.slane %v457, 0
        %v470 = vperm.slane %v458, 0
        %v471 = vperm.slane %v459, 0
        %v472 = vperm.slane %v460, 0
        %v473 = vperm.slane %v461, 0
        %v474 = vmul.f32 %v464, %v466
        %v475 = vmul.f32 %v464, %v467
        %v476 = vmul.f32 %v464, %v468
        %v477 = vmul.f32 %v464, %v469
        %v478 = vmul.f32 %v464, %v470
        %v479 = vmul.f32 %v464, %v471
        %v480 = vmul.f32 %v464, %v472
        %v481 = vmul.f32 %v464, %v473
        %490 = vrot.lane.b32.xlu0 %v474, 126
        %v491 = vpop.permute.xlu0 %490
        %492 = vrot.lane.b32.xlu0 %v475, 126
        %v493 = vpop.permute.xlu0 %492
        %494 = vrot.lane.b32.xlu0 %v476, 126
        %v495 = vpop.permute.xlu0 %494
        %496 = vrot.lane.b32.xlu0 %v477, 126
        %v497 = vpop.permute.xlu0 %496
        %498 = vrot.lane.b32.xlu0 %v478, 126
        %v499 = vpop.permute.xlu0 %498
        %500 = vrot.lane.b32.xlu0 %v479, 126
        %v501 = vpop.permute.xlu0 %500
        %502 = vrot.lane.b32.xlu0 %v480, 126
        %v503 = vpop.permute.xlu0 %502
        %504 = vrot.lane.b32.xlu0 %v481, 126
        %v505 = vpop.permute.xlu0 %504
        %vm506 = vcmask 1031168
        %v507 = vsel %vm506, %v491, %v493
        %v508 = vsel %vm506, %v495, %v497
        %v509 = vsel %vm506, %v499, %v501
        %v510 = vsel %vm506, %v503, %v505
        %v515 = vadd.f32 %v438, %v507
        %v516 = vadd.f32 %v439, %v508
        %v517 = vadd.f32 %v440, %v509
        %v518 = vadd.f32 %v441, %v510
        %v519 = vperm.slane %v454, 4
        %v520 = vperm.slane %v455, 4
        %v521 = vperm.slane %v456, 4
        %v522 = vperm.slane %v457, 4
        %v523 = vperm.slane %v458, 4
        %v524 = vperm.slane %v459, 4
        %v525 = vperm.slane %v460, 4
        %v526 = vperm.slane %v461, 4
        %v527 = vmul.f32 %v464, %v519
        %v528 = vmul.f32 %v464, %v520
        %v529 = vmul.f32 %v464, %v521
        %v530 = vmul.f32 %v464, %v522
        %v531 = vmul.f32 %v464, %v523
        %v532 = vmul.f32 %v464, %v524
        %v533 = vmul.f32 %v464, %v525
        %v534 = vmul.f32 %v464, %v526
        %543 = vrot.lane.b32.xlu0 %v527, 126
        %v544 = vpop.permute.xlu0 %543
        %545 = vrot.lane.b32.xlu0 %v528, 126
        %v546 = vpop.permute.xlu0 %545
        %547 = vrot.lane.b32.xlu0 %v529, 126
        %v548 = vpop.permute.xlu0 %547
        %549 = vrot.lane.b32.xlu0 %v530, 126
        %v550 = vpop.permute.xlu0 %549
        %551 = vrot.lane.b32.xlu0 %v531, 126
        %v552 = vpop.permute.xlu0 %551
        %553 = vrot.lane.b32.xlu0 %v532, 126
        %v554 = vpop.permute.xlu0 %553
        %555 = vrot.lane.b32.xlu0 %v533, 126
        %v556 = vpop.permute.xlu0 %555
        %557 = vrot.lane.b32.xlu0 %v534, 126
        %v558 = vpop.permute.xlu0 %557
        %v559 = vsel %vm506, %v544, %v546
        %v560 = vsel %vm506, %v548, %v550
        %v561 = vsel %vm506, %v552, %v554
        %v562 = vsel %vm506, %v556, %v558
        %v567 = vadd.f32 %v450, %v559
        %v568 = vadd.f32 %v451, %v560
        %v569 = vadd.f32 %v452, %v561
        %v570 = vadd.f32 %v453, %v562
        %571 = vset.pattern.permute.xlu0 9
        %572 = vperm.xlu0 %571, %v181
        %v573 = vpop.permute.xlu0 %572
        %v575 = vperm.slane %v454, 1
        %v576 = vperm.slane %v455, 1
        %v577 = vperm.slane %v456, 1
        %v578 = vperm.slane %v457, 1
        %v579 = vperm.slane %v458, 1
        %v580 = vperm.slane %v459, 1
        %v581 = vperm.slane %v460, 1
        %v582 = vperm.slane %v461, 1
        %v583 = vmul.f32 %v573, %v575
        %v584 = vmul.f32 %v573, %v576
        %v585 = vmul.f32 %v573, %v577
        %v586 = vmul.f32 %v573, %v578
        %v587 = vmul.f32 %v573, %v579
        %v588 = vmul.f32 %v573, %v580
        %v589 = vmul.f32 %v573, %v581
        %v590 = vmul.f32 %v573, %v582
        %599 = vrot.lane.b32.xlu0 %v583, 126
        %v600 = vpop.permute.xlu0 %599
        %601 = vrot.lane.b32.xlu0 %v584, 126
        %v602 = vpop.permute.xlu0 %601
        %603 = vrot.lane.b32.xlu0 %v585, 126
        %v604 = vpop.permute.xlu0 %603
        %605 = vrot.lane.b32.xlu0 %v586, 126
        %v606 = vpop.permute.xlu0 %605
        %607 = vrot.lane.b32.xlu0 %v587, 126
        %v608 = vpop.permute.xlu0 %607
        %609 = vrot.lane.b32.xlu0 %v588, 126
        %v610 = vpop.permute.xlu0 %609
        %611 = vrot.lane.b32.xlu0 %v589, 126
        %v612 = vpop.permute.xlu0 %611
        %613 = vrot.lane.b32.xlu0 %v590, 126
        %v614 = vpop.permute.xlu0 %613
        %v615 = vsel %vm506, %v600, %v602
        %v616 = vsel %vm506, %v604, %v606
        %v617 = vsel %vm506, %v608, %v610
        %v618 = vsel %vm506, %v612, %v614
        %v623 = vadd.f32 %v515, %v615
        %v624 = vadd.f32 %v516, %v616
        %v625 = vadd.f32 %v517, %v617
        %v626 = vadd.f32 %v518, %v618
        %v627 = vperm.slane %v454, 5
        %v628 = vperm.slane %v455, 5
        %v629 = vperm.slane %v456, 5
        %v630 = vperm.slane %v457, 5
        %v631 = vperm.slane %v458, 5
        %v632 = vperm.slane %v459, 5
        %v633 = vperm.slane %v460, 5
        %v634 = vperm.slane %v461, 5
        %v635 = vmul.f32 %v573, %v627
        %v636 = vmul.f32 %v573, %v628
        %v637 = vmul.f32 %v573, %v629
        %v638 = vmul.f32 %v573, %v630
        %v639 = vmul.f32 %v573, %v631
        %v640 = vmul.f32 %v573, %v632
        %v641 = vmul.f32 %v573, %v633
        %v642 = vmul.f32 %v573, %v634
        %651 = vrot.lane.b32.xlu0 %v635, 126
        %v652 = vpop.permute.xlu0 %651
        %653 = vrot.lane.b32.xlu0 %v636, 126
        %v654 = vpop.permute.xlu0 %653
        %655 = vrot.lane.b32.xlu0 %v637, 126
        %v656 = vpop.permute.xlu0 %655
        %657 = vrot.lane.b32.xlu0 %v638, 126
        %v658 = vpop.permute.xlu0 %657
        %659 = vrot.lane.b32.xlu0 %v639, 126
        %v660 = vpop.permute.xlu0 %659
        %661 = vrot.lane.b32.xlu0 %v640, 126
        %v662 = vpop.permute.xlu0 %661
        %663 = vrot.lane.b32.xlu0 %v641, 126
        %v664 = vpop.permute.xlu0 %663
        %665 = vrot.lane.b32.xlu0 %v642, 126
        %v666 = vpop.permute.xlu0 %665
        %v667 = vsel %vm506, %v652, %v654
        %v668 = vsel %vm506, %v656, %v658
        %v669 = vsel %vm506, %v660, %v662
        %v670 = vsel %vm506, %v664, %v666
        %v675 = vadd.f32 %v567, %v667
        %v676 = vadd.f32 %v568, %v668
        %v677 = vadd.f32 %v569, %v669
        %v678 = vadd.f32 %v570, %v670
        %679 = vset.pattern.permute.xlu0 10
        %680 = vperm.xlu0 %679, %v181
        %v681 = vpop.permute.xlu0 %680
        %v683 = vperm.slane %v454, 2
        %v684 = vperm.slane %v455, 2
        %v685 = vperm.slane %v456, 2
        %v686 = vperm.slane %v457, 2
        %v687 = vperm.slane %v458, 2
        %v688 = vperm.slane %v459, 2
        %v689 = vperm.slane %v460, 2
        %v690 = vperm.slane %v461, 2
        %v691 = vmul.f32 %v681, %v683
        %v692 = vmul.f32 %v681, %v684
        %v693 = vmul.f32 %v681, %v685
        %v694 = vmul.f32 %v681, %v686
        %v695 = vmul.f32 %v681, %v687
        %v696 = vmul.f32 %v681, %v688
        %v697 = vmul.f32 %v681, %v689
        %v698 = vmul.f32 %v681, %v690
        %707 = vrot.lane.b32.xlu0 %v691, 126
        %v708 = vpop.permute.xlu0 %707
        %709 = vrot.lane.b32.xlu0 %v692, 126
        %v710 = vpop.permute.xlu0 %709
        %711 = vrot.lane.b32.xlu0 %v693, 126
        %v712 = vpop.permute.xlu0 %711
        %713 = vrot.lane.b32.xlu0 %v694, 126
        %v714 = vpop.permute.xlu0 %713
        %715 = vrot.lane.b32.xlu0 %v695, 126
        %v716 = vpop.permute.xlu0 %715
        %717 = vrot.lane.b32.xlu0 %v696, 126
        %v718 = vpop.permute.xlu0 %717
        %719 = vrot.lane.b32.xlu0 %v697, 126
        %v720 = vpop.permute.xlu0 %719
        %721 = vrot.lane.b32.xlu0 %v698, 126
        %v722 = vpop.permute.xlu0 %721
        %v723 = vsel %vm506, %v708, %v710
        %v724 = vsel %vm506, %v712, %v714
        %v725 = vsel %vm506, %v716, %v718
        %v726 = vsel %vm506, %v720, %v722
        %v731 = vadd.f32 %v623, %v723
        %v732 = vadd.f32 %v624, %v724
        %v733 = vadd.f32 %v625, %v725
        %v734 = vadd.f32 %v626, %v726
        %v735 = vperm.slane %v454, 6
        %v736 = vperm.slane %v455, 6
        %v737 = vperm.slane %v456, 6
        %v738 = vperm.slane %v457, 6
        %v739 = vperm.slane %v458, 6
        %v740 = vperm.slane %v459, 6
        %v741 = vperm.slane %v460, 6
        %v742 = vperm.slane %v461, 6
        %v743 = vmul.f32 %v681, %v735
        %v744 = vmul.f32 %v681, %v736
        %v745 = vmul.f32 %v681, %v737
        %v746 = vmul.f32 %v681, %v738
        %v747 = vmul.f32 %v681, %v739
        %v748 = vmul.f32 %v681, %v740
        %v749 = vmul.f32 %v681, %v741
        %v750 = vmul.f32 %v681, %v742
        %759 = vrot.lane.b32.xlu0 %v743, 126
        %v760 = vpop.permute.xlu0 %759
        %761 = vrot.lane.b32.xlu0 %v744, 126
        %v762 = vpop.permute.xlu0 %761
        %763 = vrot.lane.b32.xlu0 %v745, 126
        %v764 = vpop.permute.xlu0 %763
        %765 = vrot.lane.b32.xlu0 %v746, 126
        %v766 = vpop.permute.xlu0 %765
        %767 = vrot.lane.b32.xlu0 %v747, 126
        %v768 = vpop.permute.xlu0 %767
        %769 = vrot.lane.b32.xlu0 %v748, 126
        %v770 = vpop.permute.xlu0 %769
        %771 = vrot.lane.b32.xlu0 %v749, 126
        %v772 = vpop.permute.xlu0 %771
        %773 = vrot.lane.b32.xlu0 %v750, 126
        %v774 = vpop.permute.xlu0 %773
        %v775 = vsel %vm506, %v760, %v762
        %v776 = vsel %vm506, %v764, %v766
        %v777 = vsel %vm506, %v768, %v770
        %v778 = vsel %vm506, %v772, %v774
        %v783 = vadd.f32 %v675, %v775
        %v784 = vadd.f32 %v676, %v776
        %v785 = vadd.f32 %v677, %v777
        %v786 = vadd.f32 %v678, %v778
        %787 = vset.pattern.permute.xlu0 11
        %788 = vperm.xlu0 %787, %v181
        %v789 = vpop.permute.xlu0 %788
        %v791 = vperm.slane %v454, 3
        %v792 = vperm.slane %v455, 3
        %v793 = vperm.slane %v456, 3
        %v794 = vperm.slane %v457, 3
        %v795 = vperm.slane %v458, 3
        %v796 = vperm.slane %v459, 3
        %v797 = vperm.slane %v460, 3
        %v798 = vperm.slane %v461, 3
        %v799 = vmul.f32 %v789, %v791
        %v800 = vmul.f32 %v789, %v792
        %v801 = vmul.f32 %v789, %v793
        %v802 = vmul.f32 %v789, %v794
        %v803 = vmul.f32 %v789, %v795
        %v804 = vmul.f32 %v789, %v796
        %v805 = vmul.f32 %v789, %v797
        %v806 = vmul.f32 %v789, %v798
        %815 = vrot.lane.b32.xlu0 %v799, 126
        %v816 = vpop.permute.xlu0 %815
        %817 = vrot.lane.b32.xlu0 %v800, 126
        %v818 = vpop.permute.xlu0 %817
        %819 = vrot.lane.b32.xlu0 %v801, 126
        %v820 = vpop.permute.xlu0 %819
        %821 = vrot.lane.b32.xlu0 %v802, 126
        %v822 = vpop.permute.xlu0 %821
        %823 = vrot.lane.b32.xlu0 %v803, 126
        %v824 = vpop.permute.xlu0 %823
        %825 = vrot.lane.b32.xlu0 %v804, 126
        %v826 = vpop.permute.xlu0 %825
        %827 = vrot.lane.b32.xlu0 %v805, 126
        %v828 = vpop.permute.xlu0 %827
        %829 = vrot.lane.b32.xlu0 %v806, 126
        %v830 = vpop.permute.xlu0 %829
        %v831 = vsel %vm506, %v816, %v818
        %v832 = vsel %vm506, %v820, %v822
        %v833 = vsel %vm506, %v824, %v826
        %v834 = vsel %vm506, %v828, %v830
        %v839 = vadd.f32 %v731, %v831
        %v840 = vadd.f32 %v732, %v832
        %v841 = vadd.f32 %v733, %v833
        %v842 = vadd.f32 %v734, %v834
        %v843 = vperm.slane %v454, 7
        %v844 = vperm.slane %v455, 7
        %v845 = vperm.slane %v456, 7
        %v846 = vperm.slane %v457, 7
        %v847 = vperm.slane %v458, 7
        %v848 = vperm.slane %v459, 7
        %v849 = vperm.slane %v460, 7
        %v850 = vperm.slane %v461, 7
        %v851 = vmul.f32 %v789, %v843
        %v852 = vmul.f32 %v789, %v844
        %v853 = vmul.f32 %v789, %v845
        %v854 = vmul.f32 %v789, %v846
        %v855 = vmul.f32 %v789, %v847
        %v856 = vmul.f32 %v789, %v848
        %v857 = vmul.f32 %v789, %v849
        %v858 = vmul.f32 %v789, %v850
        %867 = vrot.lane.b32.xlu0 %v851, 126
        %v868 = vpop.permute.xlu0 %867
        %869 = vrot.lane.b32.xlu0 %v852, 126
        %v870 = vpop.permute.xlu0 %869
        %871 = vrot.lane.b32.xlu0 %v853, 126
        %v872 = vpop.permute.xlu0 %871
        %873 = vrot.lane.b32.xlu0 %v854, 126
        %v874 = vpop.permute.xlu0 %873
        %875 = vrot.lane.b32.xlu0 %v855, 126
        %v876 = vpop.permute.xlu0 %875
        %877 = vrot.lane.b32.xlu0 %v856, 126
        %v878 = vpop.permute.xlu0 %877
        %879 = vrot.lane.b32.xlu0 %v857, 126
        %v880 = vpop.permute.xlu0 %879
        %881 = vrot.lane.b32.xlu0 %v858, 126
        %v882 = vpop.permute.xlu0 %881
        %v883 = vsel %vm506, %v868, %v870
        %v884 = vsel %vm506, %v872, %v874
        %v885 = vsel %vm506, %v876, %v878
        %v886 = vsel %vm506, %v880, %v882
        %v891 = vadd.f32 %v783, %v883
        %v892 = vadd.f32 %v784, %v884
        %v893 = vadd.f32 %v785, %v885
        %v894 = vadd.f32 %v786, %v886
        %v895 = vmax.f32 %v839, 0.0
        %v896 = vmax.f32 %v840, 0.0
        %v897 = vmax.f32 %v841, 0.0
        %v898 = vmax.f32 %v842, 0.0
        %v899 = vsub.f32 0.0, %v839
        %v900 = vsub.f32 0.0, %v840
        %v901 = vsub.f32 0.0, %v841
        %v902 = vsub.f32 0.0, %v842
        %v903 = vmul.f32 %v899, 1.442695
        %v904 = vpow.pop %v903
        %v905 = vmul.f32 %v900, 1.442695
        %v906 = vpow.pop %v905
        %v907 = vmul.f32 %v901, 1.442695
        %v908 = vpow.pop %v907
        %v909 = vmul.f32 %v902, 1.442695
        %v910 = vpow.pop %v909
        %v911 = vadd.f32 %v904, 1.0
        %v912 = vadd.f32 %v906, 1.0
        %v913 = vadd.f32 %v908, 1.0
        %v914 = vadd.f32 %v910, 1.0
        %v915 = vrcp.pop %v911
        %v916 = vmul.f32 %v911, %v915
        %v917 = vsub.f32 1.0, %v916
        %v918 = vmul.f32 %v915, %v917
        %v919 = vadd.f32 %v915, %v918
        %vm920 = vweird.f32 %v911
        %vm921 = vweird.f32 %v915
        %vm922 = vmor %vm920, %vm921
        %v923 = vsel %vm922, %v915, %v919
        %v924 = vand.u32 2147483647, %v911
        %vm925 = vcmp.eq.f32.partialorder %v924, 8.507059e+37
        %v926 = vand.u32 %v911, 2147483648
        %v927 = vor.u32 1.1754944e-38, %v926
        %v928 = vsel %vm925, %v927, %v923
        %v929 = vmul.f32 1.0, %v928
        %v930 = vrcp.pop %v912
        %v931 = vmul.f32 %v912, %v930
        %v932 = vsub.f32 1.0, %v931
        %v933 = vmul.f32 %v930, %v932
        %v934 = vadd.f32 %v930, %v933
        %vm935 = vweird.f32 %v912
        %vm936 = vweird.f32 %v930
        %vm937 = vmor %vm935, %vm936
        %v938 = vsel %vm937, %v930, %v934
        %v939 = vand.u32 2147483647, %v912
        %vm940 = vcmp.eq.f32.partialorder %v939, 8.507059e+37
        %v941 = vand.u32 %v912, 2147483648
        %v942 = vor.u32 1.1754944e-38, %v941
        %v943 = vsel %vm940, %v942, %v938
        %v944 = vmul.f32 1.0, %v943
        %v945 = vrcp.pop %v913
        %v946 = vmul.f32 %v913, %v945
        %v947 = vsub.f32 1.0, %v946
        %v948 = vmul.f32 %v945, %v947
        %v949 = vadd.f32 %v945, %v948
        %vm950 = vweird.f32 %v913
        %vm951 = vweird.f32 %v945
        %vm952 = vmor %vm950, %vm951
        %v953 = vsel %vm952, %v945, %v949
        %v954 = vand.u32 2147483647, %v913
        %vm955 = vcmp.eq.f32.partialorder %v954, 8.507059e+37
        %v956 = vand.u32 %v913, 2147483648
        %v957 = vor.u32 1.1754944e-38, %v956
        %v958 = vsel %vm955, %v957, %v953
        %v959 = vmul.f32 1.0, %v958
        %v960 = vrcp.pop %v914
        %v961 = vmul.f32 %v914, %v960
        %v962 = vsub.f32 1.0, %v961
        %v963 = vmul.f32 %v960, %v962
        %v964 = vadd.f32 %v960, %v963
        %vm965 = vweird.f32 %v914
        %vm966 = vweird.f32 %v960
        %vm967 = vmor %vm965, %vm966
        %v968 = vsel %vm967, %v960, %v964
        %v969 = vand.u32 2147483647, %v914
        %vm970 = vcmp.eq.f32.partialorder %v969, 8.507059e+37
        %v971 = vand.u32 %v914, 2147483648
        %v972 = vor.u32 1.1754944e-38, %v971
        %v973 = vsel %vm970, %v972, %v968
        %v974 = vmul.f32 1.0, %v973
        %v975 = vsub.f32 %v895, %v182
        %v976 = vsub.f32 %v896, %v183
        %v977 = vsub.f32 %v897, %v184
        %v978 = vsub.f32 %v898, %v185
        %v983 = vrot.slane %v975, 4
        %v984 = vrot.slane %v976, 4
        %v985 = vrot.slane %v977, 4
        %v986 = vrot.slane %v978, 4
        %v991 = vmul.f32 %v929, %v983
        %v992 = vmul.f32 %v944, %v984
        %v993 = vmul.f32 %v959, %v985
        %v994 = vmul.f32 %v974, %v986
        %v999 = vrot.slane %v991, 4
        %v1000 = vrot.slane %v992, 4
        %v1001 = vrot.slane %v993, 4
        %v1002 = vrot.slane %v994, 4
        %v1007 = vadd.f32 %v182, %v999
        %v1008 = vadd.f32 %v183, %v1000
        %v1009 = vadd.f32 %v184, %v1001
        %v1010 = vadd.f32 %v185, %v1002
        %1011 = vst [vmem:[%s178] sm:$0xf] %v1007
        %1012 = vst [vmem:[%s178 + $0x8] sm:$0xf] %v1008
        %1013 = vst [vmem:[%s178 + $0x10] sm:$0xf] %v1009
        %1014 = vst [vmem:[%s178 + $0x18] sm:$0xf] %v1010
        %v1015 = vmax.f32 %v891, 0.0
        %v1016 = vmax.f32 %v892, 0.0
        %v1017 = vmax.f32 %v893, 0.0
        %v1018 = vmax.f32 %v894, 0.0
        %v1019 = vsub.f32 0.0, %v891
        %v1020 = vsub.f32 0.0, %v892
        %v1021 = vsub.f32 0.0, %v893
        %v1022 = vsub.f32 0.0, %v894
        %v1023 = vmul.f32 %v1019, 1.442695
        %v1024 = vpow.pop %v1023
        %v1025 = vmul.f32 %v1020, 1.442695
        %v1026 = vpow.pop %v1025
        %v1027 = vmul.f32 %v1021, 1.442695
        %v1028 = vpow.pop %v1027
        %v1029 = vmul.f32 %v1022, 1.442695
        %v1030 = vpow.pop %v1029
        %v1031 = vadd.f32 %v1024, 1.0
        %v1032 = vadd.f32 %v1026, 1.0
        %v1033 = vadd.f32 %v1028, 1.0
        %v1034 = vadd.f32 %v1030, 1.0
        %v1035 = vrcp.pop %v1031
        %v1036 = vmul.f32 %v1031, %v1035
        %v1037 = vsub.f32 1.0, %v1036
        %v1038 = vmul.f32 %v1035, %v1037
        %v1039 = vadd.f32 %v1035, %v1038
        %vm1040 = vweird.f32 %v1031
        %vm1041 = vweird.f32 %v1035
        %vm1042 = vmor %vm1040, %vm1041
        %v1043 = vsel %vm1042, %v1035, %v1039
        %v1044 = vand.u32 2147483647, %v1031
        %vm1045 = vcmp.eq.f32.partialorder %v1044, 8.507059e+37
        %v1046 = vand.u32 %v1031, 2147483648
        %v1047 = vor.u32 1.1754944e-38, %v1046
        %v1048 = vsel %vm1045, %v1047, %v1043
        %v1049 = vmul.f32 1.0, %v1048
        %v1050 = vrcp.pop %v1032
        %v1051 = vmul.f32 %v1032, %v1050
        %v1052 = vsub.f32 1.0, %v1051
        %v1053 = vmul.f32 %v1050, %v1052
        %v1054 = vadd.f32 %v1050, %v1053
        %vm1055 = vweird.f32 %v1032
        %vm1056 = vweird.f32 %v1050
        %vm1057 = vmor %vm1055, %vm1056
        %v1058 = vsel %vm1057, %v1050, %v1054
        %v1059 = vand.u32 2147483647, %v1032
        %vm1060 = vcmp.eq.f32.partialorder %v1059, 8.507059e+37
        %v1061 = vand.u32 %v1032, 2147483648
        %v1062 = vor.u32 1.1754944e-38, %v1061
        %v1063 = vsel %vm1060, %v1062, %v1058
        %v1064 = vmul.f32 1.0, %v1063
        %v1065 = vrcp.pop %v1033
        %v1066 = vmul.f32 %v1033, %v1065
        %v1067 = vsub.f32 1.0, %v1066
        %v1068 = vmul.f32 %v1065, %v1067
        %v1069 = vadd.f32 %v1065, %v1068
        %vm1070 = vweird.f32 %v1033
        %vm1071 = vweird.f32 %v1065
        %vm1072 = vmor %vm1070, %vm1071
        %v1073 = vsel %vm1072, %v1065, %v1069
        %v1074 = vand.u32 2147483647, %v1033
        %vm1075 = vcmp.eq.f32.partialorder %v1074, 8.507059e+37
        %v1076 = vand.u32 %v1033, 2147483648
        %v1077 = vor.u32 1.1754944e-38, %v1076
        %v1078 = vsel %vm1075, %v1077, %v1073
        %v1079 = vmul.f32 1.0, %v1078
        %v1080 = vrcp.pop %v1034
        %v1081 = vmul.f32 %v1034, %v1080
        %v1082 = vsub.f32 1.0, %v1081
        %v1083 = vmul.f32 %v1080, %v1082
        %v1084 = vadd.f32 %v1080, %v1083
        %vm1085 = vweird.f32 %v1034
        %vm1086 = vweird.f32 %v1080
        %vm1087 = vmor %vm1085, %vm1086
        %v1088 = vsel %vm1087, %v1080, %v1084
        %v1089 = vand.u32 2147483647, %v1034
        %vm1090 = vcmp.eq.f32.partialorder %v1089, 8.507059e+37
        %v1091 = vand.u32 %v1034, 2147483648
        %v1092 = vor.u32 1.1754944e-38, %v1091
        %v1093 = vsel %vm1090, %v1092, %v1088
        %v1094 = vmul.f32 1.0, %v1093
        %v1095 = vrot.slane %v182, 4
        %v1096 = vrot.slane %v183, 4
        %v1097 = vrot.slane %v184, 4
        %v1098 = vrot.slane %v185, 4
        %v1103 = vsub.f32 %v1015, %v1095
        %v1104 = vsub.f32 %v1016, %v1096
        %v1105 = vsub.f32 %v1017, %v1097
        %v1106 = vsub.f32 %v1018, %v1098
        %v1111 = vrot.slane %v1103, 4
        %v1112 = vrot.slane %v1104, 4
        %v1113 = vrot.slane %v1105, 4
        %v1114 = vrot.slane %v1106, 4
        %v1119 = vmul.f32 %v1049, %v1111
        %v1120 = vmul.f32 %v1064, %v1112
        %v1121 = vmul.f32 %v1079, %v1113
        %v1122 = vmul.f32 %v1094, %v1114
        %v1123 = vadd.f32 %v182, %v1119
        %v1124 = vadd.f32 %v183, %v1120
        %v1125 = vadd.f32 %v184, %v1121
        %v1126 = vadd.f32 %v185, %v1122
        %1127 = vst [vmem:[%s178] sm:$0xf0] %v1123
        %1128 = vst [vmem:[%s178 + $0x8] sm:$0xf0] %v1124
        %1129 = vst [vmem:[%s178 + $0x10] sm:$0xf0] %v1125
        %1130 = vst [vmem:[%s178 + $0x18] sm:$0xf0] %v1126
        %s1131 = sand.u32 %s75, 1
        %s1132 = scalar_lea.sflag [#allocation5], %s1131
        %s1133 = sand.u32 %s75, 1
        %s1134 = smul.addr %s1133, 32
        %s1135 = scalar_lea.vmem [#allocation8], %s1134
        // Predicated region
        $region37: #{tpu_custom_call.1} parent=27 // pred_check
          %p1136 = pneg %p85
        $region38: #{tpu_custom_call.1} parent=27 // pred_check_branch
          %1138 = sbr.rel (%p1136) target = $region40
        $region39: #{tpu_custom_call.1} parent=27 // pred_region
          %s1139 = smul.u32 4, %s20
          %1141 = vsyncadd %s1132, 0
          %s1142 = smul.addr %s1139, 8
          %s1143 = scalar_lea.hbm %s2, %s1142
          %s1144 = sshll.u32 %s1135, 4
          %s1145 = int_to_ptr.vmem [resolvable:$true] %s1144
          %s1146 = sshll.u32 %s1143, 4
          %s1147 = int_to_ptr.hbm [resolvable:$true] %s1146
          %1152 = dma.vmem_to_hbm [thread:$0]  %s1145, 512, %s1147, %s1132, 128, 128, 8
        $region40: #{tpu_custom_call.1} parent=27 // pred_fallthru
          _
      $region28: #{tpu_custom_call.1} parent=5 // pred_fallthru
        _
      %p1153 = scmp.le.s32.totalorder 2, %s15
      // Predicated region
      $region41: #{tpu_custom_call.1} parent=5 // pred_check
        %p1154 = pneg %p1153
      $region42: #{tpu_custom_call.1} parent=5 // pred_check_branch
        %1156 = sbr.rel (%p1154) target = $region44
      $region43: #{tpu_custom_call.1} parent=5 // pred_region
        %s1157 = ssub.s32 %s15, 2
        // Predicated region
        $region45: #{tpu_custom_call.1} parent=43 // pred_check
          %p1158 = pneg %p91
        $region46: #{tpu_custom_call.1} parent=43 // pred_check_branch
          %1160 = sbr.rel (%p1158) target = $region48
        $region47: #{tpu_custom_call.1} parent=43 // pred_region
          %s1161 = sand.u32 %s76, 1
          %s1162 = scalar_lea.sflag [#allocation5], %s1161
          %s1163 = sand.u32 %s76, 1
          %s1164 = smul.addr %s1163, 32
          %s1165 = scalar_lea.vmem [#allocation8], %s1164
          %1167 = dma.done %s1162, 512
        $region48: #{tpu_custom_call.1} parent=43 // pred_fallthru
          _
      $region44: #{tpu_custom_call.1} parent=5 // pred_fallthru
        _
    $region6: #{tpu_custom_call.1} parent=1 // loop_footer
      %s19 = sadd.s32 1, %s15
    $region7: #{tpu_custom_call.1} parent=1 // loop_footer_branch
      %14 = sbr.rel target = $region3
    $region8: #{tpu_custom_call.1} parent=1 // loop_exit
      _
    %1168 = vsyncpa [#allocation4], 1
    %s1169 = scalar_lea.sflag [#allocation4], 1
    %1170 = vsyncpa %s1169, 1
    %1171 = vsyncpa [#allocation7], 1
    %1172 = vsyncpa [#allocation5], 1
    %s1173 = scalar_lea.sflag [#allocation5], 1
    %1174 = vsyncpa %s1173, 1

</llo_original>
